<compile_context>
chip_gen: v7x
topology: tpu7x:2x2x1
jax: 0.10.0
libtpu: 0.0.40
codegen_flags: <defaults>
</compile_context>

<pallas_src>
import jax
import jax.numpy as jnp
from jax.experimental import pallas as pl
from jax.experimental.pallas import tpu as pltpu


def _gnn_kernel(a_ref, m_ref, x_ref, w1_ref, b1_ref, w2_ref, b2_ref, o_ref):
    # Layer 1: GCNConv(input -> hidden) + ReLU.  bf16 operands, f32 MXU accumulation.
    xw = jnp.dot(x_ref[0], w1_ref[...], preferred_element_type=jnp.float32)        # [N, H] f32
    h1 = jnp.dot(a_ref[0], xw.astype(jnp.bfloat16),
                 preferred_element_type=jnp.float32) + b1_ref[...]                 # [N, H] f32
    h1 = jnp.maximum(h1, 0.0)
    # Dropout(p=0.2): identity in eval mode.
    # TODO(synk): training-mode dropout would use pltpu.prng_seed / pltpu.prng_random_bits.

    # Layer 2: GCNConv(hidden -> output) with global_mean_pool folded in:
    #   mean_i (A_hat @ (h1 @ W2))_i + b2  ==  ((1/N) 1^T A_hat) @ (h1 @ W2) + b2
    hw = jnp.dot(h1.astype(jnp.bfloat16), w2_ref[...],
                 preferred_element_type=jnp.float32)                               # [N, O] f32
    o_ref[0] = (
        jnp.dot(m_ref[0], hw.astype(jnp.bfloat16), preferred_element_type=jnp.float32)
        + b2_ref[...]
    )                                                                              # [1, O] f32


def _build_a_hat(edge_index, n):
    """Dense symmetric-normalized adjacency with self-loops (PyG gcn_norm)."""
    src = edge_index[0]
    dst = edge_index[1]
    # PyG convention: message flows src -> dst, i.e. out[dst] += norm * x[src] @ W
    adj = jnp.zeros((n, n), dtype=jnp.float32).at[dst, src].add(1.0)
    adj = adj + jnp.eye(n, dtype=jnp.float32)
    deg = jnp.sum(adj, axis=1)
    dinv = jnp.where(deg > 0, jax.lax.rsqrt(deg), 0.0)
    return dinv[:, None] * adj * dinv[None, :]


def simple_gnn_forward_batched(x_b, edge_index_b, w1, b1, w2, b2):
    """Batched forward over B independent graphs that share weights.

    x_b:          [B, N, input_dim]   float32
    edge_index_b: [B, 2, E]           int32
    returns       [B, output_dim]     float32  (per-graph global_mean_pool embedding)
    """
    B, N, F = x_b.shape
    H = w1.shape[1]
    O = w2.shape[1]

    # --- glue (plain JAX): dense normalized adjacency + pooled row vector, per graph ---
    a_hat = jax.vmap(lambda ei: _build_a_hat(ei, N))(edge_index_b)        # [B, N, N] f32
    m = jnp.mean(a_hat, axis=1, keepdims=True)                            # [B, 1, N] = (1/N) 1^T A_hat

    # bf16 on the DMA-dominant operands; biases stay f32 (accumulation stays f32 in-kernel).
    a_bf = a_hat.astype(jnp.bfloat16)
    m_bf = m.astype(jnp.bfloat16)
    x_bf = x_b.astype(jnp.bfloat16)
    w1_bf = w1.astype(jnp.bfloat16)
    w2_bf = w2.astype(jnp.bfloat16)
    b1_2d = b1.reshape(1, -1).astype(jnp.float32)
    b2_2d = b2.reshape(1, -1).astype(jnp.float32)

    out = pl.pallas_call(
        _gnn_kernel,
        out_shape=jax.ShapeDtypeStruct((B, 1, O), jnp.float32),
        grid_spec=pltpu.PrefetchScalarGridSpec(
            num_scalar_prefetch=0,
            grid=(B,),
            in_specs=[
                pl.BlockSpec((1, N, N), lambda b: (b, 0, 0)),   # A_hat   : per-graph block
                pl.BlockSpec((1, 1, N), lambda b: (b, 0, 0)),   # m       : per-graph pooled row
                pl.BlockSpec((1, N, F), lambda b: (b, 0, 0)),   # X       : per-graph block
                pl.BlockSpec((F, H), lambda b: (0, 0)),          # W1      : resident across graphs
                pl.BlockSpec((1, H), lambda b: (0, 0)),          # b1      : resident
                pl.BlockSpec((H, O), lambda b: (0, 0)),          # W2      : resident
                pl.BlockSpec((1, O), lambda b: (0, 0)),          # b2      : resident
            ],
            out_specs=pl.BlockSpec((1, 1, O), lambda b: (b, 0, 0)),
        ),
        compiler_params=pltpu.CompilerParams(
            dimension_semantics=("parallel",),   # v7x: two TensorCores split the graph axis
        ),
    )(a_bf, m_bf, x_bf, w1_bf, b1_2d, w2_bf, b2_2d)

    return out[:, 0, :]                                                   # [B, O]


def simple_gnn_forward(x, edge_index, w1, b1, w2, b2):
    """Single-graph forward matching SimpleGNN.forward -> [1, output_dim]."""
    return simple_gnn_forward_batched(x[None], edge_index[None], w1, b1, w2, b2)


def _reference_single(x, edge_index, w1, b1, w2, b2):
    """Pure-JAX f32 reference for one graph."""
    n = x.shape[0]
    a_hat = _build_a_hat(edge_index, n)
    h1 = jnp.maximum(a_hat @ (x @ w1) + b1[None, :], 0.0)
    h2 = a_hat @ (h1 @ w2) + b2[None, :]
    return jnp.mean(h2, axis=0, keepdims=True)                            # [1, O]


if __name__ == "__main__":
    # Small shapes consistent with SimpleGNN(input_dim=768, hidden_dim=256, output_dim=128)
    B = 4             # graphs sharing the weights (weights stay VMEM-resident over the grid)
    N = 16            # nodes per graph
    INPUT_DIM = 768
    HIDDEN_DIM = 256
    OUTPUT_DIM = 128

    key = jax.random.PRNGKey(0)
    kx, kw1, kb1, kw2, kb2 = jax.random.split(key, 5)

    # Node features for each graph
    x_b = jax.random.normal(kx, (B, N, INPUT_DIM), dtype=jnp.float32)

    # Deterministic graphs: undirected ring with per-graph stride (1..B)
    idx = jnp.arange(N, dtype=jnp.int32)

    def make_edges(stride):
        nxt = (idx + stride) % N
        return jnp.stack(
            [jnp.concatenate([idx, nxt]), jnp.concatenate([nxt, idx])], axis=0
        )  # [2, 2N]

    edge_index_b = jnp.stack([make_edges(s + 1) for s in range(B)], axis=0)  # [B, 2, 2N]

    # GCNConv parameters (glorot-ish weights, small random biases — deterministic, synthetic)
    w1 = jax.random.normal(kw1, (INPUT_DIM, HIDDEN_DIM), dtype=jnp.float32) / jnp.sqrt(INPUT_DIM)
    b1 = 0.1 * jax.random.normal(kb1, (HIDDEN_DIM,), dtype=jnp.float32)
    w2 = jax.random.normal(kw2, (HIDDEN_DIM, OUTPUT_DIM), dtype=jnp.float32) / jnp.sqrt(HIDDEN_DIM)
    b2 = 0.1 * jax.random.normal(kb2, (OUTPUT_DIM,), dtype=jnp.float32)

    # Batched run (weights DMA'd once, resident across the B-graph grid).
    out_b = simple_gnn_forward_batched(x_b, edge_index_b, w1, b1, w2, b2)
    out_b = jax.block_until_ready(out_b)
    assert out_b.shape == (B, OUTPUT_DIM), out_b.shape

    ref_b = jnp.concatenate(
        [_reference_single(x_b[g], edge_index_b[g], w1, b1, w2, b2) for g in range(B)], axis=0
    )
    # bf16 operands with f32 accumulation -> ~1e-2 relative error vs. the f32 reference.
    assert jnp.allclose(out_b, ref_b, atol=5e-2, rtol=5e-2), (
        float(jnp.max(jnp.abs(out_b - ref_b)))
    )

    # Single-graph API (matches SimpleGNN.forward exactly: one graph, batch == zeros).
    out_1 = simple_gnn_forward(x_b[0], edge_index_b[0], w1, b1, w2, b2)
    out_1 = jax.block_until_ready(out_1)
    assert out_1.shape == (1, OUTPUT_DIM), out_1.shape
    assert jnp.allclose(out_1, ref_b[0:1], atol=5e-2, rtol=5e-2), (
        float(jnp.max(jnp.abs(out_1 - ref_b[0:1])))
    )

    print("KERNEL_OK")
</pallas_src>

<mosaic_0001>
module attributes {stable_mosaic.version = 11 : i64} {
  func.func @_gnn_kernel(%arg0: i32, %arg1: memref<1x16x16xbf16, #tpu.memory_space<vmem>>, %arg2: memref<1x1x16xbf16, #tpu.memory_space<vmem>>, %arg3: memref<1x16x768xbf16, #tpu.memory_space<vmem>>, %arg4: memref<768x256xbf16, #tpu.memory_space<vmem>>, %arg5: memref<1x256xf32, #tpu.memory_space<vmem>>, %arg6: memref<256x128xbf16, #tpu.memory_space<vmem>>, %arg7: memref<1x128xf32, #tpu.memory_space<vmem>>, %arg8: memref<1x1x128xf32, #tpu.memory_space<vmem>>) attributes {dimension_semantics = [#tpu.dimension_semantics<parallel>], iteration_bounds = array<i64: 4>, scalar_prefetch = 0 : i64, scratch_operands = 0 : i64, tpu.core_type = #tpu.core_type<tc>, window_params = [{transform_indices = @transform_0, window_bounds = array<i64: 1, 16, 16>}, {transform_indices = @transform_1, window_bounds = array<i64: 1, 1, 16>}, {transform_indices = @transform_2, window_bounds = array<i64: 1, 16, 768>}, {pipeline_mode = #tpu.pipeline_mode<synchronous>, transform_indices = @transform_3, window_bounds = array<i64: 768, 256>}, {pipeline_mode = #tpu.pipeline_mode<synchronous>, transform_indices = @transform_4, window_bounds = array<i64: 1, 256>}, {pipeline_mode = #tpu.pipeline_mode<synchronous>, transform_indices = @transform_5, window_bounds = array<i64: 256, 128>}, {pipeline_mode = #tpu.pipeline_mode<synchronous>, transform_indices = @transform_6, window_bounds = array<i64: 1, 128>}, {transform_indices = @transform_7, window_bounds = array<i64: 1, 1, 128>}]} {
    %c0 = arith.constant 0 : index
    %c0_0 = arith.constant 0 : index
    %c0_1 = arith.constant 0 : index
    %0 = vector.load %arg3[%c0, %c0_0, %c0_1] : memref<1x16x768xbf16, #tpu.memory_space<vmem>>, vector<1x16x768xbf16>
    %1 = vector.shape_cast %0 : vector<1x16x768xbf16> to vector<16x768xbf16>
    %c0_2 = arith.constant 0 : index
    %c0_3 = arith.constant 0 : index
    %2 = vector.load %arg4[%c0_2, %c0_3] : memref<768x256xbf16, #tpu.memory_space<vmem>>, vector<768x256xbf16>
    %cst = arith.constant dense<0.000000e+00> : vector<16x256xf32>
    %3 = tpu.matmul %1, %2, %cst {dimension_numbers = #tpu.dot_dimension_numbers<[1], [0], [0], [1], [0, 0, 1, 1], [], []>} : vector<16x768xbf16>, vector<768x256xbf16>, vector<16x256xf32> -> vector<16x256xf32>
    %c0_4 = arith.constant 0 : index
    %c0_5 = arith.constant 0 : index
    %c0_6 = arith.constant 0 : index
    %4 = vector.load %arg1[%c0_4, %c0_5, %c0_6] : memref<1x16x16xbf16, #tpu.memory_space<vmem>>, vector<1x16x16xbf16>
    %5 = vector.shape_cast %4 : vector<1x16x16xbf16> to vector<16x16xbf16>
    %6 = arith.truncf %3 : vector<16x256xf32> to vector<16x256xbf16>
    %cst_7 = arith.constant dense<0.000000e+00> : vector<16x256xf32>
    %7 = tpu.matmul %5, %6, %cst_7 {dimension_numbers = #tpu.dot_dimension_numbers<[1], [0], [0], [1], [0, 0, 1, 1], [], []>} : vector<16x16xbf16>, vector<16x256xbf16>, vector<16x256xf32> -> vector<16x256xf32>
    %c0_8 = arith.constant 0 : index
    %c0_9 = arith.constant 0 : index
    %8 = vector.load %arg5[%c0_8, %c0_9] : memref<1x256xf32, #tpu.memory_space<vmem>>, vector<1x256xf32>
    %9 = vector.broadcast %8 : vector<1x256xf32> to vector<16x256xf32>
    %10 = arith.addf %7, %9 : vector<16x256xf32>
    %cst_10 = arith.constant 0.000000e+00 : f32
    %11 = vector.broadcast %cst_10 : f32 to vector<16x256xf32>
    %12 = arith.maximumf %10, %11 : vector<16x256xf32>
    %13 = arith.truncf %12 : vector<16x256xf32> to vector<16x256xbf16>
    %c0_11 = arith.constant 0 : index
    %c0_12 = arith.constant 0 : index
    %14 = vector.load %arg6[%c0_11, %c0_12] : memref<256x128xbf16, #tpu.memory_space<vmem>>, vector<256x128xbf16>
    %cst_13 = arith.constant dense<0.000000e+00> : vector<16x128xf32>
    %15 = tpu.matmul %13, %14, %cst_13 {dimension_numbers = #tpu.dot_dimension_numbers<[1], [0], [0], [1], [0, 0, 1, 1], [], []>} : vector<16x256xbf16>, vector<256x128xbf16>, vector<16x128xf32> -> vector<16x128xf32>
    %c0_14 = arith.constant 0 : index
    %c0_15 = arith.constant 0 : index
    %c0_16 = arith.constant 0 : index
    %16 = vector.load %arg2[%c0_14, %c0_15, %c0_16] : memref<1x1x16xbf16, #tpu.memory_space<vmem>>, vector<1x1x16xbf16>
    %17 = vector.shape_cast %16 : vector<1x1x16xbf16> to vector<1x16xbf16>
    %18 = arith.truncf %15 : vector<16x128xf32> to vector<16x128xbf16>
    %cst_17 = arith.constant dense<0.000000e+00> : vector<1x128xf32>
    %19 = tpu.matmul %17, %18, %cst_17 {dimension_numbers = #tpu.dot_dimension_numbers<[1], [0], [0], [1], [0, 0, 1, 1], [], []>} : vector<1x16xbf16>, vector<16x128xbf16>, vector<1x128xf32> -> vector<1x128xf32>
    %c0_18 = arith.constant 0 : index
    %c0_19 = arith.constant 0 : index
    %20 = vector.load %arg7[%c0_18, %c0_19] : memref<1x128xf32, #tpu.memory_space<vmem>>, vector<1x128xf32>
    %21 = arith.addf %19, %20 : vector<1x128xf32>
    %c0_20 = arith.constant 0 : index
    %c0_21 = arith.constant 0 : index
    %c0_22 = arith.constant 0 : index
    %22 = vector.load %arg8[%c0_20, %c0_21, %c0_22] : memref<1x1x128xf32, #tpu.memory_space<vmem>>, vector<1x1x128xf32>
    %23 = vector.shape_cast %22 : vector<1x1x128xf32> to vector<1x128xf32>
    %24 = vector.shape_cast %21 : vector<1x128xf32> to vector<1x1x128xf32>
    tpu.vector_store %arg8[%c0_20, %c0_21, %c0_22], %24 {strides = array<i32>} : memref<1x1x128xf32, #tpu.memory_space<vmem>>, vector<1x1x128xf32>,
    return
  }
  func.func @transform_0(%arg0: i32) -> (i32, i32, i32) {
    %c0_i32 = arith.constant 0 : i32
    %c0_i32_0 = arith.constant 0 : i32
    %c0_i32_1 = arith.constant 0 : i32
    return %arg0, %c0_i32, %c0_i32_0 : i32, i32, i32
  }
  func.func @transform_1(%arg0: i32) -> (i32, i32, i32) {
    %c0_i32 = arith.constant 0 : i32
    %c0_i32_0 = arith.constant 0 : i32
    %c0_i32_1 = arith.constant 0 : i32
    return %arg0, %c0_i32, %c0_i32_0 : i32, i32, i32
  }
  func.func @transform_2(%arg0: i32) -> (i32, i32, i32) {
    %c0_i32 = arith.constant 0 : i32
    %c0_i32_0 = arith.constant 0 : i32
    %c0_i32_1 = arith.constant 0 : i32
    return %arg0, %c0_i32, %c0_i32_0 : i32, i32, i32
  }
  func.func @transform_3(%arg0: i32) -> (i32, i32) {
    %c0_i32 = arith.constant 0 : i32
    %c0_i32_0 = arith.constant 0 : i32
    %c0_i32_1 = arith.constant 0 : i32
    return %c0_i32, %c0_i32_0 : i32, i32
  }
  func.func @transform_4(%arg0: i32) -> (i32, i32) {
    %c0_i32 = arith.constant 0 : i32
    %c0_i32_0 = arith.constant 0 : i32
    %c0_i32_1 = arith.constant 0 : i32
    return %c0_i32, %c0_i32_0 : i32, i32
  }
  func.func @transform_5(%arg0: i32) -> (i32, i32) {
    %c0_i32 = arith.constant 0 : i32
    %c0_i32_0 = arith.constant 0 : i32
    %c0_i32_1 = arith.constant 0 : i32
    return %c0_i32, %c0_i32_0 : i32, i32
  }
  func.func @transform_6(%arg0: i32) -> (i32, i32) {
    %c0_i32 = arith.constant 0 : i32
    %c0_i32_0 = arith.constant 0 : i32
    %c0_i32_1 = arith.constant 0 : i32
    return %c0_i32, %c0_i32_0 : i32, i32
  }
  func.func @transform_7(%arg0: i32) -> (i32, i32, i32) {
    %c0_i32 = arith.constant 0 : i32
    %c0_i32_0 = arith.constant 0 : i32
    %c0_i32_1 = arith.constant 0 : i32
    return %arg0, %c0_i32, %c0_i32_0 : i32, i32, i32
  }
}

</mosaic_0001>

<llo_original>
// kernel: tpu_custom_call.1
$region0: #{tpu_custom_call.1}
  #allocation0 [shape = 'u32[]', space=smem, size = 0x4, offset = 0x4, fixed_abs, tag = 'smem constant byte address 0x4 - core index']
  #allocation1 [shape = 'u32[144,128]{1,0:T(1,128)}', space=vmem, size = 0x12000, scoped, tag = 'internal scratch']
  %s0 = inlined_call_operand.hbm [shape: bf16[4,16,16], index: 0, kind: input, shape index: {}]
  %s1 = inlined_call_operand.vmem [shape: bf16[4,1,16], index: 1, kind: input, shape index: {}]
  %s2 = inlined_call_operand.hbm [shape: bf16[4,16,768], index: 2, kind: input, shape index: {}]
  %s3 = inlined_call_operand.hbm [shape: bf16[768,256], index: 3, kind: input, shape index: {}]
  %s4 = inlined_call_operand.vmem [shape: f32[1,256], index: 4, kind: input, shape index: {}]
  %s5 = inlined_call_operand.hbm [shape: bf16[256,128], index: 5, kind: input, shape index: {}]
  %s6 = inlined_call_operand.vmem [shape: f32[1,128], index: 6, kind: input, shape index: {}]
  %s7 = inlined_call_operand.hbm [shape: f32[4,1,128], index: 7, kind: output, shape index: {}]
  %s8 = sld [smem:[#allocation0]]
  $region77: #{tpu_custom_call.1} parent=0
    _
  %s10 = ssub.s32 1, %s8
  %s11 = scalar_select 0, %s10, %s8
  $region1: #{tpu_custom_call.1} parent=0
    #allocation2 [shape = 'u8[8192]{0}', space=vmem, size = 0x2000, scoped, tag = 'input window, operand 0']
    #allocation3 [shape = 's32[2]{0}', space=sflag, size = 0x8, scoped, tag = 'scoped memory for tpu_custom_call.1']
    #allocation4 [shape = 's32[2]{0}', space=sflag, size = 0x8, scoped, tag = 'scoped memory for tpu_custom_call.1']
    #allocation5 [shape = 'u8[49152]{0}', space=vmem, size = 0xc000, scoped, tag = 'input window, operand 2']
    #allocation6 [shape = 's32[2]{0}', space=sflag, size = 0x8, scoped, tag = 'scoped memory for tpu_custom_call.1']
    #allocation7 [shape = 'u8[393216]{0}', space=vmem, size = 0x60000, scoped, tag = 'input window, operand 3, single buffered']
    #allocation8 [shape = 'u8[65536]{0}', space=vmem, size = 0x10000, scoped, tag = 'input window, operand 5, single buffered']
    #allocation9 [shape = 's32[1]{0}', space=sflag, size = 0x4, scoped, tag = 'scoped memory for tpu_custom_call.1']
    #allocation10 [shape = 'u8[1024]{0}', space=vmem, size = 0x400, scoped, tag = 'output window, operand 0']
    %12 = vsyncpa [#allocation3], 0
    %s13 = scalar_lea.sflag [#allocation3], 1
    %14 = vsyncpa %s13, 0
    %15 = vsyncpa [#allocation6], 0
    %s16 = scalar_lea.sflag [#allocation6], 1
    %17 = vsyncpa %s16, 0
    %18 = vsyncpa [#allocation9], 0
    %19 = vsyncpa [#allocation4], 0
    %s20 = scalar_lea.sflag [#allocation4], 1
    %21 = vsyncpa %s20, 0
    loop: start=0, step=1, limit=6
    $region2: #{tpu_custom_call.1} parent=1 // loop_pre_header
      _
    $region3: #{tpu_custom_call.1} parent=1 // loop_header
      %s23 = sphi 0, %s27
      %p24 = scmp.ge.s32.totalorder %s23, 6
      %s33 = sphi 0, %s35
      %s36 = sphi 0, %s33
      %s37 = sphi 0, %s36
      %s53 = sphi 0, %s37
      %s59 = sphi 0, %s61
      %s62 = sphi 0, %s59
      %s63 = sphi 0, %s62
      %s79 = sphi 0, %s63
      %s85 = sphi 0, %s87
      %s88 = sphi 0, %s85
      %s89 = sphi 0, %s88
      %s105 = sphi 0, %s89
      %s109 = sphi 0, %s109
      %s111 = sphi 0, %s109
      %s112 = sphi 0, %s111
      %s126 = sphi 0, %s112
      %s130 = sphi 0, %s130
      %s132 = sphi 0, %s130
      %s133 = sphi 0, %s132
      %s147 = sphi 0, %s133
      %s151 = sphi 0, %s151
      %s153 = sphi 0, %s151
      %s154 = sphi 0, %s153
      %s168 = sphi 0, %s154
      %s172 = sphi 0, %s172
      %s174 = sphi 0, %s172
      %s175 = sphi 0, %s174
      %s189 = sphi 0, %s175
      %s195 = sphi 0, %s197
      %s198 = sphi 0, %s195
      %s199 = sphi 0, %s198
      %s215 = sphi 0, %s199
    $region4: #{tpu_custom_call.1} parent=1 // loop_header_branch
      %26 = sbr.rel (%p24) target = $region8
    $region5: #{tpu_custom_call.1} parent=1 // loop_body
      %s28 = ssub.s32 %s23, 1
      %s29 = ssub.s32 %s23, 2
      %s30 = sadd.s32 %s23, 1
      %s31 = ssub.s32 %s23, %s30
      %p32 = scmp.eq.s32.totalorder %s31, 0
      %s34 = sadd.s32 %s33, 1
      %s35 = scalar_select %p32, %s33, %s34
      %p38 = pneg %p32
      %p39 = scmp.eq.s32.totalorder %s23, 3
      %p40 = por %p38, %p39
      %p41 = scmp.ne.s32.totalorder %s33, %s36
      %p42 = scmp.eq.s32.totalorder %s23, 0
      %p43 = por %p41, %p42
      %p44 = scmp.ne.s32.totalorder %s33, %s36
      %p45 = scmp.eq.s32.totalorder %s28, 3
      %p46 = por %p44, %p45
      %p47 = scmp.ne.s32.totalorder %s36, %s37
      %p48 = scmp.eq.s32.totalorder %s28, 0
      %p49 = por %p47, %p48
      %p50 = scmp.ne.s32.totalorder %s36, %s37
      %p51 = scmp.eq.s32.totalorder %s29, 3
      %p52 = por %p50, %p51
      %p54 = scmp.ne.s32.totalorder %s37, %s53
      %p55 = scmp.eq.s32.totalorder %s29, 0
      %p56 = por %p54, %p55
      %s57 = ssub.s32 %s23, %s30
      %p58 = scmp.eq.s32.totalorder %s57, 0
      %s60 = sadd.s32 %s59, 1
      %s61 = scalar_select %p58, %s59, %s60
      %p64 = pneg %p58
      %p65 = scmp.eq.s32.totalorder %s23, 3
      %p66 = por %p64, %p65
      %p67 = scmp.ne.s32.totalorder %s59, %s62
      %p68 = scmp.eq.s32.totalorder %s23, 0
      %p69 = por %p67, %p68
      %p70 = scmp.ne.s32.totalorder %s59, %s62
      %p71 = scmp.eq.s32.totalorder %s28, 3
      %p72 = por %p70, %p71
      %p73 = scmp.ne.s32.totalorder %s62, %s63
      %p74 = scmp.eq.s32.totalorder %s28, 0
      %p75 = por %p73, %p74
      %p76 = scmp.ne.s32.totalorder %s62, %s63
      %p77 = scmp.eq.s32.totalorder %s29, 3
      %p78 = por %p76, %p77
      %p80 = scmp.ne.s32.totalorder %s63, %s79
      %p81 = scmp.eq.s32.totalorder %s29, 0
      %p82 = por %p80, %p81
      %s83 = ssub.s32 %s23, %s30
      %p84 = scmp.eq.s32.totalorder %s83, 0
      %s86 = sadd.s32 %s85, 1
      %s87 = scalar_select %p84, %s85, %s86
      %p90 = pneg %p84
      %p91 = scmp.eq.s32.totalorder %s23, 3
      %p92 = por %p90, %p91
      %p93 = scmp.ne.s32.totalorder %s85, %s88
      %p94 = scmp.eq.s32.totalorder %s23, 0
      %p95 = por %p93, %p94
      %p96 = scmp.ne.s32.totalorder %s85, %s88
      %p97 = scmp.eq.s32.totalorder %s28, 3
      %p98 = por %p96, %p97
      %p99 = scmp.ne.s32.totalorder %s88, %s89
      %p100 = scmp.eq.s32.totalorder %s28, 0
      %p101 = por %p99, %p100
      %p102 = scmp.ne.s32.totalorder %s88, %s89
      %p103 = scmp.eq.s32.totalorder %s29, 3
      %p104 = por %p102, %p103
      %p106 = scmp.ne.s32.totalorder %s89, %s105
      %p107 = scmp.eq.s32.totalorder %s29, 0
      %p108 = por %p106, %p107
      %s110 = sadd.s32 %s109, 1
      %p113 = scmp.eq.s32.totalorder %s23, 3
      %p114 = scmp.ne.s32.totalorder %s109, %s111
      %p115 = scmp.eq.s32.totalorder %s23, 0
      %p116 = por %p114, %p115
      %p117 = scmp.ne.s32.totalorder %s109, %s111
      %p118 = scmp.eq.s32.totalorder %s28, 3
      %p119 = por %p117, %p118
      %p120 = scmp.ne.s32.totalorder %s111, %s112
      %p121 = scmp.eq.s32.totalorder %s28, 0
      %p122 = por %p120, %p121
      %p123 = scmp.ne.s32.totalorder %s111, %s112
      %p124 = scmp.eq.s32.totalorder %s29, 3
      %p125 = por %p123, %p124
      %p127 = scmp.ne.s32.totalorder %s112, %s126
      %p128 = scmp.eq.s32.totalorder %s29, 0
      %p129 = por %p127, %p128
      %s131 = sadd.s32 %s130, 1
      %p134 = scmp.eq.s32.totalorder %s23, 3
      %p135 = scmp.ne.s32.totalorder %s130, %s132
      %p136 = scmp.eq.s32.totalorder %s23, 0
      %p137 = por %p135, %p136
      %p138 = scmp.ne.s32.totalorder %s130, %s132
      %p139 = scmp.eq.s32.totalorder %s28, 3
      %p140 = por %p138, %p139
      %p141 = scmp.ne.s32.totalorder %s132, %s133
      %p142 = scmp.eq.s32.totalorder %s28, 0
      %p143 = por %p141, %p142
      %p144 = scmp.ne.s32.totalorder %s132, %s133
      %p145 = scmp.eq.s32.totalorder %s29, 3
      %p146 = por %p144, %p145
      %p148 = scmp.ne.s32.totalorder %s133, %s147
      %p149 = scmp.eq.s32.totalorder %s29, 0
      %p150 = por %p148, %p149
      %s152 = sadd.s32 %s151, 1
      %p155 = scmp.eq.s32.totalorder %s23, 3
      %p156 = scmp.ne.s32.totalorder %s151, %s153
      %p157 = scmp.eq.s32.totalorder %s23, 0
      %p158 = por %p156, %p157
      %p159 = scmp.ne.s32.totalorder %s151, %s153
      %p160 = scmp.eq.s32.totalorder %s28, 3
      %p161 = por %p159, %p160
      %p162 = scmp.ne.s32.totalorder %s153, %s154
      %p163 = scmp.eq.s32.totalorder %s28, 0
      %p164 = por %p162, %p163
      %p165 = scmp.ne.s32.totalorder %s153, %s154
      %p166 = scmp.eq.s32.totalorder %s29, 3
      %p167 = por %p165, %p166
      %p169 = scmp.ne.s32.totalorder %s154, %s168
      %p170 = scmp.eq.s32.totalorder %s29, 0
      %p171 = por %p169, %p170
      %s173 = sadd.s32 %s172, 1
      %p176 = scmp.eq.s32.totalorder %s23, 3
      %p177 = scmp.ne.s32.totalorder %s172, %s174
      %p178 = scmp.eq.s32.totalorder %s23, 0
      %p179 = por %p177, %p178
      %p180 = scmp.ne.s32.totalorder %s172, %s174
      %p181 = scmp.eq.s32.totalorder %s28, 3
      %p182 = por %p180, %p181
      %p183 = scmp.ne.s32.totalorder %s174, %s175
      %p184 = scmp.eq.s32.totalorder %s28, 0
      %p185 = por %p183, %p184
      %p186 = scmp.ne.s32.totalorder %s174, %s175
      %p187 = scmp.eq.s32.totalorder %s29, 3
      %p188 = por %p186, %p187
      %p190 = scmp.ne.s32.totalorder %s175, %s189
      %p191 = scmp.eq.s32.totalorder %s29, 0
      %p192 = por %p190, %p191
      %s193 = ssub.s32 %s23, %s30
      %p194 = scmp.eq.s32.totalorder %s193, 0
      %s196 = sadd.s32 %s195, 1
      %s197 = scalar_select %p194, %s195, %s196
      %p200 = pneg %p194
      %p201 = scmp.eq.s32.totalorder %s23, 3
      %p202 = por %p200, %p201
      %p203 = scmp.ne.s32.totalorder %s195, %s198
      %p204 = scmp.eq.s32.totalorder %s23, 0
      %p205 = por %p203, %p204
      %p206 = scmp.ne.s32.totalorder %s195, %s198
      %p207 = scmp.eq.s32.totalorder %s28, 3
      %p208 = por %p206, %p207
      %p209 = scmp.ne.s32.totalorder %s198, %s199
      %p210 = scmp.eq.s32.totalorder %s28, 0
      %p211 = por %p209, %p210
      %p212 = scmp.ne.s32.totalorder %s198, %s199
      %p213 = scmp.eq.s32.totalorder %s29, 3
      %p214 = por %p212, %p213
      %p216 = scmp.ne.s32.totalorder %s199, %s215
      %p217 = scmp.eq.s32.totalorder %s29, 0
      %p218 = por %p216, %p217
      %p219 = scmp.le.s32.totalorder 1, %s23
      %p220 = scmp.lt.s32.totalorder %s23, 5
      %p221 = pnand %p219, %p220
      %p222 = pneg %p221
      // Predicated region
      $region9: #{tpu_custom_call.1} parent=5 // pred_check
        _
      $region10: #{tpu_custom_call.1} parent=5 // pred_check_branch
        %224 = sbr.rel (%p221) target = $region12
      $region11: #{tpu_custom_call.1} parent=5 // pred_region
        %s225 = ssub.s32 %s23, 1
        // Predicated region
        $region13: #{tpu_custom_call.1} parent=11 // pred_check
          %p226 = pneg %p122
        $region14: #{tpu_custom_call.1} parent=11 // pred_check_branch
          %228 = sbr.rel (%p226) target = $region16
        $region15: #{tpu_custom_call.1} parent=11 // pred_region
          %s230 = ssub.s32 12288, 12288
          %231 = vsyncadd [#allocation6], %s230
          %s232 = sshll.u32 [#allocation7], 4
          %s233 = int_to_ptr.vmem [resolvable:$true] %s232
          %238 = dma.hbm_to_vmem [thread:$0]  %s3, 12288, %s233, [#allocation6], 128, 128, 8
        $region16: #{tpu_custom_call.1} parent=11 // pred_fallthru
          _
        // Predicated region
        $region17: #{tpu_custom_call.1} parent=11 // pred_check
          %p239 = pneg %p143
        $region18: #{tpu_custom_call.1} parent=11 // pred_check_branch
          %241 = sbr.rel (%p239) target = $region20
        $region19: #{tpu_custom_call.1} parent=11 // pred_region
          _
        $region20: #{tpu_custom_call.1} parent=11 // pred_fallthru
          _
        // Predicated region
        $region21: #{tpu_custom_call.1} parent=11 // pred_check
          %p242 = pneg %p164
        $region22: #{tpu_custom_call.1} parent=11 // pred_check_branch
          %244 = sbr.rel (%p242) target = $region24
        $region23: #{tpu_custom_call.1} parent=11 // pred_region
          %s246 = ssub.s32 2048, 2048
          %247 = vsyncadd [#allocation9], %s246
          %s248 = sshll.u32 [#allocation8], 4
          %s249 = int_to_ptr.vmem [resolvable:$true] %s248
          %254 = dma.hbm_to_vmem [thread:$0]  %s5, 2048, %s249, [#allocation9], 64, 64, 4
        $region24: #{tpu_custom_call.1} parent=11 // pred_fallthru
          _
        // Predicated region
        $region25: #{tpu_custom_call.1} parent=11 // pred_check
          %p255 = pneg %p185
        $region26: #{tpu_custom_call.1} parent=11 // pred_check_branch
          %257 = sbr.rel (%p255) target = $region28
        $region27: #{tpu_custom_call.1} parent=11 // pred_region
          _
        $region28: #{tpu_custom_call.1} parent=11 // pred_fallthru
          _
      $region12: #{tpu_custom_call.1} parent=5 // pred_fallthru
        _
      %p258 = scmp.lt.s32.totalorder %s23, 4
      // Predicated region
      $region29: #{tpu_custom_call.1} parent=5 // pred_check
        %p259 = pneg %p258
      $region30: #{tpu_custom_call.1} parent=5 // pred_check_branch
        %261 = sbr.rel (%p259) target = $region32
      $region31: #{tpu_custom_call.1} parent=5 // pred_region
        // Predicated region
        $region33: #{tpu_custom_call.1} parent=31 // pred_check
          %p262 = pneg %p43
        $region34: #{tpu_custom_call.1} parent=31 // pred_check_branch
          %264 = sbr.rel (%p262) target = $region36
        $region35: #{tpu_custom_call.1} parent=31 // pred_region
          %s265 = sand.u32 %s33, 1
          %s266 = scalar_lea.sflag [#allocation3], %s265
          %s267 = sand.u32 %s33, 1
          %s268 = smul.addr %s267, 8
          %s269 = scalar_lea.vmem [#allocation2], %s268
          %s271 = ssub.s32 128, 128
          %272 = vsyncadd %s266, %s271
          %s273 = smul.addr %s23, 2
          %s274 = smul.addr %s273, 64
          %s275 = scalar_lea.hbm %s0, %s274
          %s276 = sshll.u32 %s269, 4
          %s277 = int_to_ptr.vmem [resolvable:$true] %s276
          %282 = dma.hbm_to_vmem [thread:$0]  %s275, 128, %s277, %s266, 64, 64, 4
        $region36: #{tpu_custom_call.1} parent=31 // pred_fallthru
          _
        // Predicated region
        $region37: #{tpu_custom_call.1} parent=31 // pred_check
          %p283 = pneg %p69
        $region38: #{tpu_custom_call.1} parent=31 // pred_check_branch
          %285 = sbr.rel (%p283) target = $region40
        $region39: #{tpu_custom_call.1} parent=31 // pred_region
          %p286 = scmp.lt.s32.totalorder %s23, 3
          %s287 = scalar_select %p286, %s23, 3
          %s288 = scalar_lea.vmem %s1, %s287
        $region40: #{tpu_custom_call.1} parent=31 // pred_fallthru
          _
        // Predicated region
        $region41: #{tpu_custom_call.1} parent=31 // pred_check
          %p289 = pneg %p95
        $region42: #{tpu_custom_call.1} parent=31 // pred_check_branch
          %291 = sbr.rel (%p289) target = $region44
        $region43: #{tpu_custom_call.1} parent=31 // pred_region
          %s292 = sand.u32 %s23, 1
          %s293 = scalar_lea.sflag [#allocation6], %s292
          %s294 = sand.u32 %s85, 1
          %s295 = smul.addr %s294, 48
          %s296 = scalar_lea.vmem [#allocation5], %s295
          %s298 = ssub.s32 768, 768
          %299 = vsyncadd %s293, %s298
          %s300 = smul.addr %s23, 12
          %s301 = smul.addr %s300, 64
          %s302 = scalar_lea.hbm %s2, %s301
          %s303 = sshll.u32 %s296, 4
          %s304 = int_to_ptr.vmem [resolvable:$true] %s303
          %309 = dma.hbm_to_vmem [thread:$0]  %s302, 768, %s304, %s293, 384, 384, 24
        $region44: #{tpu_custom_call.1} parent=31 // pred_fallthru
          _
      $region32: #{tpu_custom_call.1} parent=5 // pred_fallthru
        _
      %p310 = scmp.le.s32.totalorder 1, %s23
      %p311 = scmp.lt.s32.totalorder %s23, 5
      %p312 = pnand %p310, %p311
      %p313 = pneg %p312
      // Predicated region
      $region45: #{tpu_custom_call.1} parent=5 // pred_check
        _
      $region46: #{tpu_custom_call.1} parent=5 // pred_check_branch
        %315 = sbr.rel (%p312) target = $region48
      $region47: #{tpu_custom_call.1} parent=5 // pred_region
        %s316 = ssub.s32 %s23, 1
        %s317 = sand.u32 %s36, 1
        %s318 = scalar_lea.sflag [#allocation3], %s317
        %s319 = sand.u32 %s36, 1
        %s320 = smul.addr %s319, 8
        %s321 = scalar_lea.vmem [#allocation2], %s320
        // Predicated region
        $region49: #{tpu_custom_call.1} parent=47 // pred_check
          %p322 = pneg %p49
        $region50: #{tpu_custom_call.1} parent=47 // pred_check_branch
          %324 = sbr.rel (%p322) target = $region52
        $region51: #{tpu_custom_call.1} parent=47 // pred_region
          %325 = dma.done %s318, 128
        $region52: #{tpu_custom_call.1} parent=47 // pred_fallthru
          _
        %s326 = sand.u32 %s28, 1
        %s327 = scalar_lea.sflag [#allocation6], %s326
        %s328 = sand.u32 %s88, 1
        %s329 = smul.addr %s328, 48
        %s330 = scalar_lea.vmem [#allocation5], %s329
        // Predicated region
        $region53: #{tpu_custom_call.1} parent=47 // pred_check
          %p331 = pneg %p101
        $region54: #{tpu_custom_call.1} parent=47 // pred_check_branch
          %333 = sbr.rel (%p331) target = $region56
        $region55: #{tpu_custom_call.1} parent=47 // pred_region
          %334 = dma.done %s327, 768
        $region56: #{tpu_custom_call.1} parent=47 // pred_fallthru
          _
        // Predicated region
        $region57: #{tpu_custom_call.1} parent=47 // pred_check
          %p335 = pneg %p122
        $region58: #{tpu_custom_call.1} parent=47 // pred_check_branch
          %337 = sbr.rel (%p335) target = $region60
        $region59: #{tpu_custom_call.1} parent=47 // pred_region
          %338 = dma.done [#allocation6], 12288
        $region60: #{tpu_custom_call.1} parent=47 // pred_fallthru
          _
        // Predicated region
        $region61: #{tpu_custom_call.1} parent=47 // pred_check
          %p339 = pneg %p164
        $region62: #{tpu_custom_call.1} parent=47 // pred_check_branch
          %341 = sbr.rel (%p339) target = $region64
        $region63: #{tpu_custom_call.1} parent=47 // pred_region
          %342 = dma.done [#allocation9], 2048
        $region64: #{tpu_custom_call.1} parent=47 // pred_fallthru
          _
        %s343 = sand.u32 %s36, 1
        %s344 = scalar_lea.sflag [#allocation3], %s343
        %s345 = sand.u32 %s36, 1
        %s346 = smul.addr %s345, 8
        %s347 = scalar_lea.vmem [#allocation2], %s346
        %p348 = pneg %p49
        %p349 = pneg %p46
        %p350 = scmp.lt.s32.totalorder %s28, 3
        %s351 = scalar_select %p350, %s28, 3
        %s352 = scalar_lea.vmem %s1, %s351
        %p353 = pneg %p75
        %p354 = pneg %p72
        %s355 = sand.u32 %s28, 1
        %s356 = scalar_lea.sflag [#allocation6], %s355
        %s357 = sand.u32 %s88, 1
        %s358 = smul.addr %s357, 48
        %s359 = scalar_lea.vmem [#allocation5], %s358
        %p360 = pneg %p101
        %p361 = pneg %p98
        %p362 = pneg %p122
        %p363 = pneg %p119
        %p364 = pneg %p143
        %p365 = pneg %p140
        %p366 = pneg %p164
        %p367 = pneg %p161
        %p368 = pneg %p185
        %p369 = pneg %p182
        %p370 = pneg %p211
        %p371 = pneg %p208
        %s372 = sand.u32 %s198, 1
        %s373 = scalar_lea.sflag [#allocation4], %s372
        %s374 = sand.u32 %s198, 1
        %s375 = scalar_lea.vmem [#allocation10], %s374
        %p376 = scmp.lt.s32.totalorder %s28, 3
        %s377 = scalar_select %p376, %s28, 3
        %s378 = scalar_lea.vmem %s1, %s377
        %v380 = vld [vmem:[%s330] sm:$0xff]
        %v381 = vld [vmem:[%s330 + $0x8] sm:$0xff]
        %v382 = vld [vmem:[%s330 + $0x10] sm:$0xff]
        %v383 = vld [vmem:[%s330 + $0x18] sm:$0xff]
        %v384 = vld [vmem:[%s330 + $0x20] sm:$0xff]
        %v385 = vld [vmem:[%s330 + $0x28] sm:$0xff]
        %v386 = vld [vmem:[#allocation7] sm:$0xff]
        %v387 = vld [vmem:[#allocation7 + $0x8] sm:$0xff]
        %v388 = vld [vmem:[#allocation7 + $0x10] sm:$0xff]
        %v389 = vld [vmem:[#allocation7 + $0x18] sm:$0xff]
        %v390 = vld [vmem:[#allocation7 + $0x20] sm:$0xff]
        %v391 = vld [vmem:[#allocation7 + $0x28] sm:$0xff]
        %v392 = vld [vmem:[#allocation7 + $0x30] sm:$0xff]
        %v393 = vld [vmem:[#allocation7 + $0x38] sm:$0xff]
        %v394 = vld [vmem:[#allocation7 + $0x40] sm:$0xff]
        %v395 = vld [vmem:[#allocation7 + $0x48] sm:$0xff]
        %v396 = vld [vmem:[#allocation7 + $0x50] sm:$0xff]
        %v397 = vld [vmem:[#allocation7 + $0x58] sm:$0xff]
        %v398 = vld [vmem:[#allocation7 + $0x60] sm:$0xff]
        %v399 = vld [vmem:[#allocation7 + $0x68] sm:$0xff]
        %v400 = vld [vmem:[#allocation7 + $0x70] sm:$0xff]
        %v401 = vld [vmem:[#allocation7 + $0x78] sm:$0xff]
        %v402 = vld [vmem:[#allocation7 + $0x80] sm:$0xff]
        %v403 = vld [vmem:[#allocation7 + $0x88] sm:$0xff]
        %v404 = vld [vmem:[#allocation7 + $0x90] sm:$0xff]
        %v405 = vld [vmem:[#allocation7 + $0x98] sm:$0xff]
        %v406 = vld [vmem:[#allocation7 + $0xa0] sm:$0xff]
        %v407 = vld [vmem:[#allocation7 + $0xa8] sm:$0xff]
        %v408 = vld [vmem:[#allocation7 + $0xb0] sm:$0xff]
        %v409 = vld [vmem:[#allocation7 + $0xb8] sm:$0xff]
        %v410 = vld [vmem:[#allocation7 + $0xc0] sm:$0xff]
        %v411 = vld [vmem:[#allocation7 + $0xc8] sm:$0xff]
        %v412 = vld [vmem:[#allocation7 + $0xd0] sm:$0xff]
        %v413 = vld [vmem:[#allocation7 + $0xd8] sm:$0xff]
        %v414 = vld [vmem:[#allocation7 + $0xe0] sm:$0xff]
        %v415 = vld [vmem:[#allocation7 + $0xe8] sm:$0xff]
        %v416 = vld [vmem:[#allocation7 + $0xf0] sm:$0xff]
        %v417 = vld [vmem:[#allocation7 + $0xf8] sm:$0xff]
        %v418 = vld [vmem:[#allocation7 + $0x100] sm:$0xff]
        %v419 = vld [vmem:[#allocation7 + $0x108] sm:$0xff]
        %v420 = vld [vmem:[#allocation7 + $0x110] sm:$0xff]
        %v421 = vld [vmem:[#allocation7 + $0x118] sm:$0xff]
        %v422 = vld [vmem:[#allocation7 + $0x120] sm:$0xff]
        %v423 = vld [vmem:[#allocation7 + $0x128] sm:$0xff]
        %v424 = vld [vmem:[#allocation7 + $0x130] sm:$0xff]
        %v425 = vld [vmem:[#allocation7 + $0x138] sm:$0xff]
        %v426 = vld [vmem:[#allocation7 + $0x140] sm:$0xff]
        %v427 = vld [vmem:[#allocation7 + $0x148] sm:$0xff]
        %v428 = vld [vmem:[#allocation7 + $0x150] sm:$0xff]
        %v429 = vld [vmem:[#allocation7 + $0x158] sm:$0xff]
        %v430 = vld [vmem:[#allocation7 + $0x160] sm:$0xff]
        %v431 = vld [vmem:[#allocation7 + $0x168] sm:$0xff]
        %v432 = vld [vmem:[#allocation7 + $0x170] sm:$0xff]
        %v433 = vld [vmem:[#allocation7 + $0x178] sm:$0xff]
        %v434 = vld [vmem:[#allocation7 + $0x180] sm:$0xff]
        %v435 = vld [vmem:[#allocation7 + $0x188] sm:$0xff]
        %v436 = vld [vmem:[#allocation7 + $0x190] sm:$0xff]
        %v437 = vld [vmem:[#allocation7 + $0x198] sm:$0xff]
        %v438 = vld [vmem:[#allocation7 + $0x1a0] sm:$0xff]
        %v439 = vld [vmem:[#allocation7 + $0x1a8] sm:$0xff]
        %v440 = vld [vmem:[#allocation7 + $0x1b0] sm:$0xff]
        %v441 = vld [vmem:[#allocation7 + $0x1b8] sm:$0xff]
        %v442 = vld [vmem:[#allocation7 + $0x1c0] sm:$0xff]
        %v443 = vld [vmem:[#allocation7 + $0x1c8] sm:$0xff]
        %v444 = vld [vmem:[#allocation7 + $0x1d0] sm:$0xff]
        %v445 = vld [vmem:[#allocation7 + $0x1d8] sm:$0xff]
        %v446 = vld [vmem:[#allocation7 + $0x1e0] sm:$0xff]
        %v447 = vld [vmem:[#allocation7 + $0x1e8] sm:$0xff]
        %v448 = vld [vmem:[#allocation7 + $0x1f0] sm:$0xff]
        %v449 = vld [vmem:[#allocation7 + $0x1f8] sm:$0xff]
        %v450 = vld [vmem:[#allocation7 + $0x200] sm:$0xff]
        %v451 = vld [vmem:[#allocation7 + $0x208] sm:$0xff]
        %v452 = vld [vmem:[#allocation7 + $0x210] sm:$0xff]
        %v453 = vld [vmem:[#allocation7 + $0x218] sm:$0xff]
        %v454 = vld [vmem:[#allocation7 + $0x220] sm:$0xff]
        %v455 = vld [vmem:[#allocation7 + $0x228] sm:$0xff]
        %v456 = vld [vmem:[#allocation7 + $0x230] sm:$0xff]
        %v457 = vld [vmem:[#allocation7 + $0x238] sm:$0xff]
        %v458 = vld [vmem:[#allocation7 + $0x240] sm:$0xff]
        %v459 = vld [vmem:[#allocation7 + $0x248] sm:$0xff]
        %v460 = vld [vmem:[#allocation7 + $0x250] sm:$0xff]
        %v461 = vld [vmem:[#allocation7 + $0x258] sm:$0xff]
        %v462 = vld [vmem:[#allocation7 + $0x260] sm:$0xff]
        %v463 = vld [vmem:[#allocation7 + $0x268] sm:$0xff]
        %v464 = vld [vmem:[#allocation7 + $0x270] sm:$0xff]
        %v465 = vld [vmem:[#allocation7 + $0x278] sm:$0xff]
        %v466 = vld [vmem:[#allocation7 + $0x280] sm:$0xff]
        %v467 = vld [vmem:[#allocation7 + $0x288] sm:$0xff]
        %v468 = vld [vmem:[#allocation7 + $0x290] sm:$0xff]
        %v469 = vld [vmem:[#allocation7 + $0x298] sm:$0xff]
        %v470 = vld [vmem:[#allocation7 + $0x2a0] sm:$0xff]
        %v471 = vld [vmem:[#allocation7 + $0x2a8] sm:$0xff]
        %v472 = vld [vmem:[#allocation7 + $0x2b0] sm:$0xff]
        %v473 = vld [vmem:[#allocation7 + $0x2b8] sm:$0xff]
        %v474 = vld [vmem:[#allocation7 + $0x2c0] sm:$0xff]
        %v475 = vld [vmem:[#allocation7 + $0x2c8] sm:$0xff]
        %v476 = vld [vmem:[#allocation7 + $0x2d0] sm:$0xff]
        %v477 = vld [vmem:[#allocation7 + $0x2d8] sm:$0xff]
        %v478 = vld [vmem:[#allocation7 + $0x2e0] sm:$0xff]
        %v479 = vld [vmem:[#allocation7 + $0x2e8] sm:$0xff]
        %v480 = vld [vmem:[#allocation7 + $0x2f0] sm:$0xff]
        %v481 = vld [vmem:[#allocation7 + $0x2f8] sm:$0xff]
        %v488 = vunpack.c.l.b16 %v380
        %v489 = vunpack.c.h.b16 %v380
        %v490 = vunpack.c.l.b16 %v381
        %v491 = vunpack.c.h.b16 %v381
        %v492 = vunpack.c.l.b16 %v382
        %v493 = vunpack.c.h.b16 %v382
        %v494 = vunpack.c.l.b16 %v383
        %v495 = vunpack.c.h.b16 %v383
        %v496 = vunpack.c.l.b16 %v384
        %v497 = vunpack.c.h.b16 %v384
        %v498 = vunpack.c.l.b16 %v385
        %v499 = vunpack.c.h.b16 %v385
        %v500 = vpack.c.b16 %v494, %v488
        %v501 = vpack.c.b16 %v495, %v489
        %v502 = vpack.c.b16 %v496, %v490
        %v503 = vpack.c.b16 %v497, %v491
        %v504 = vpack.c.b16 %v498, %v492
        %v505 = vpack.c.b16 %v499, %v493
        %v608 = vunpack.c.l.b16 %v386
        %v609 = vunpack.c.h.b16 %v386
        %v610 = vunpack.c.l.b16 %v387
        %v611 = vunpack.c.h.b16 %v387
        %v612 = vunpack.c.l.b16 %v388
        %v613 = vunpack.c.h.b16 %v388
        %v614 = vunpack.c.l.b16 %v389
        %v615 = vunpack.c.h.b16 %v389
        %v616 = vunpack.c.l.b16 %v390
        %v617 = vunpack.c.h.b16 %v390
        %v618 = vunpack.c.l.b16 %v391
        %v619 = vunpack.c.h.b16 %v391
        %v620 = vunpack.c.l.b16 %v392
        %v621 = vunpack.c.h.b16 %v392
        %v622 = vunpack.c.l.b16 %v393
        %v623 = vunpack.c.h.b16 %v393
        %v624 = vunpack.c.l.b16 %v394
        %v625 = vunpack.c.h.b16 %v394
        %v626 = vunpack.c.l.b16 %v395
        %v627 = vunpack.c.h.b16 %v395
        %v628 = vunpack.c.l.b16 %v396
        %v629 = vunpack.c.h.b16 %v396
        %v630 = vunpack.c.l.b16 %v397
        %v631 = vunpack.c.h.b16 %v397
        %v632 = vunpack.c.l.b16 %v398
        %v633 = vunpack.c.h.b16 %v398
        %v634 = vunpack.c.l.b16 %v399
        %v635 = vunpack.c.h.b16 %v399
        %v636 = vunpack.c.l.b16 %v400
        %v637 = vunpack.c.h.b16 %v400
        %v638 = vunpack.c.l.b16 %v401
        %v639 = vunpack.c.h.b16 %v401
        %v640 = vunpack.c.l.b16 %v402
        %v641 = vunpack.c.h.b16 %v402
        %v642 = vunpack.c.l.b16 %v403
        %v643 = vunpack.c.h.b16 %v403
        %v644 = vunpack.c.l.b16 %v404
        %v645 = vunpack.c.h.b16 %v404
        %v646 = vunpack.c.l.b16 %v405
        %v647 = vunpack.c.h.b16 %v405
        %v648 = vunpack.c.l.b16 %v406
        %v649 = vunpack.c.h.b16 %v406
        %v650 = vunpack.c.l.b16 %v407
        %v651 = vunpack.c.h.b16 %v407
        %v652 = vunpack.c.l.b16 %v408
        %v653 = vunpack.c.h.b16 %v408
        %v654 = vunpack.c.l.b16 %v409
        %v655 = vunpack.c.h.b16 %v409
        %v656 = vunpack.c.l.b16 %v410
        %v657 = vunpack.c.h.b16 %v410
        %v658 = vunpack.c.l.b16 %v411
        %v659 = vunpack.c.h.b16 %v411
        %v660 = vunpack.c.l.b16 %v412
        %v661 = vunpack.c.h.b16 %v412
        %v662 = vunpack.c.l.b16 %v413
        %v663 = vunpack.c.h.b16 %v413
        %v664 = vunpack.c.l.b16 %v414
        %v665 = vunpack.c.h.b16 %v414
        %v666 = vunpack.c.l.b16 %v415
        %v667 = vunpack.c.h.b16 %v415
        %v668 = vunpack.c.l.b16 %v416
        %v669 = vunpack.c.h.b16 %v416
        %v670 = vunpack.c.l.b16 %v417
        %v671 = vunpack.c.h.b16 %v417
        %v672 = vunpack.c.l.b16 %v418
        %v673 = vunpack.c.h.b16 %v418
        %v674 = vunpack.c.l.b16 %v419
        %v675 = vunpack.c.h.b16 %v419
        %v676 = vunpack.c.l.b16 %v420
        %v677 = vunpack.c.h.b16 %v420
        %v678 = vunpack.c.l.b16 %v421
        %v679 = vunpack.c.h.b16 %v421
        %v680 = vunpack.c.l.b16 %v422
        %v681 = vunpack.c.h.b16 %v422
        %v682 = vunpack.c.l.b16 %v423
        %v683 = vunpack.c.h.b16 %v423
        %v684 = vunpack.c.l.b16 %v424
        %v685 = vunpack.c.h.b16 %v424
        %v686 = vunpack.c.l.b16 %v425
        %v687 = vunpack.c.h.b16 %v425
        %v688 = vunpack.c.l.b16 %v426
        %v689 = vunpack.c.h.b16 %v426
        %v690 = vunpack.c.l.b16 %v427
        %v691 = vunpack.c.h.b16 %v427
        %v692 = vunpack.c.l.b16 %v428
        %v693 = vunpack.c.h.b16 %v428
        %v694 = vunpack.c.l.b16 %v429
        %v695 = vunpack.c.h.b16 %v429
        %v696 = vunpack.c.l.b16 %v430
        %v697 = vunpack.c.h.b16 %v430
        %v698 = vunpack.c.l.b16 %v431
        %v699 = vunpack.c.h.b16 %v431
        %v700 = vunpack.c.l.b16 %v432
        %v701 = vunpack.c.h.b16 %v432
        %v702 = vunpack.c.l.b16 %v433
        %v703 = vunpack.c.h.b16 %v433
        %v704 = vunpack.c.l.b16 %v434
        %v705 = vunpack.c.h.b16 %v434
        %v706 = vunpack.c.l.b16 %v435
        %v707 = vunpack.c.h.b16 %v435
        %v708 = vunpack.c.l.b16 %v436
        %v709 = vunpack.c.h.b16 %v436
        %v710 = vunpack.c.l.b16 %v437
        %v711 = vunpack.c.h.b16 %v437
        %v712 = vunpack.c.l.b16 %v438
        %v713 = vunpack.c.h.b16 %v438
        %v714 = vunpack.c.l.b16 %v439
        %v715 = vunpack.c.h.b16 %v439
        %v716 = vunpack.c.l.b16 %v440
        %v717 = vunpack.c.h.b16 %v440
        %v718 = vunpack.c.l.b16 %v441
        %v719 = vunpack.c.h.b16 %v441
        %v720 = vunpack.c.l.b16 %v442
        %v721 = vunpack.c.h.b16 %v442
        %v722 = vunpack.c.l.b16 %v443
        %v723 = vunpack.c.h.b16 %v443
        %v724 = vunpack.c.l.b16 %v444
        %v725 = vunpack.c.h.b16 %v444
        %v726 = vunpack.c.l.b16 %v445
        %v727 = vunpack.c.h.b16 %v445
        %v728 = vunpack.c.l.b16 %v446
        %v729 = vunpack.c.h.b16 %v446
        %v730 = vunpack.c.l.b16 %v447
        %v731 = vunpack.c.h.b16 %v447
        %v732 = vunpack.c.l.b16 %v448
        %v733 = vunpack.c.h.b16 %v448
        %v734 = vunpack.c.l.b16 %v449
        %v735 = vunpack.c.h.b16 %v449
        %v736 = vunpack.c.l.b16 %v450
        %v737 = vunpack.c.h.b16 %v450
        %v738 = vunpack.c.l.b16 %v451
        %v739 = vunpack.c.h.b16 %v451
        %v740 = vunpack.c.l.b16 %v452
        %v741 = vunpack.c.h.b16 %v452
        %v742 = vunpack.c.l.b16 %v453
        %v743 = vunpack.c.h.b16 %v453
        %v744 = vunpack.c.l.b16 %v454
        %v745 = vunpack.c.h.b16 %v454
        %v746 = vunpack.c.l.b16 %v455
        %v747 = vunpack.c.h.b16 %v455
        %v748 = vunpack.c.l.b16 %v456
        %v749 = vunpack.c.h.b16 %v456
        %v750 = vunpack.c.l.b16 %v457
        %v751 = vunpack.c.h.b16 %v457
        %v752 = vunpack.c.l.b16 %v458
        %v753 = vunpack.c.h.b16 %v458
        %v754 = vunpack.c.l.b16 %v459
        %v755 = vunpack.c.h.b16 %v459
        %v756 = vunpack.c.l.b16 %v460
        %v757 = vunpack.c.h.b16 %v460
        %v758 = vunpack.c.l.b16 %v461
        %v759 = vunpack.c.h.b16 %v461
        %v760 = vunpack.c.l.b16 %v462
        %v761 = vunpack.c.h.b16 %v462
        %v762 = vunpack.c.l.b16 %v463
        %v763 = vunpack.c.h.b16 %v463
        %v764 = vunpack.c.l.b16 %v464
        %v765 = vunpack.c.h.b16 %v464
        %v766 = vunpack.c.l.b16 %v465
        %v767 = vunpack.c.h.b16 %v465
        %v768 = vunpack.c.l.b16 %v466
        %v769 = vunpack.c.h.b16 %v466
        %v770 = vunpack.c.l.b16 %v467
        %v771 = vunpack.c.h.b16 %v467
        %v772 = vunpack.c.l.b16 %v468
        %v773 = vunpack.c.h.b16 %v468
        %v774 = vunpack.c.l.b16 %v469
        %v775 = vunpack.c.h.b16 %v469
        %v776 = vunpack.c.l.b16 %v470
        %v777 = vunpack.c.h.b16 %v470
        %v778 = vunpack.c.l.b16 %v471
        %v779 = vunpack.c.h.b16 %v471
        %v780 = vunpack.c.l.b16 %v472
        %v781 = vunpack.c.h.b16 %v472
        %v782 = vunpack.c.l.b16 %v473
        %v783 = vunpack.c.h.b16 %v473
        %v784 = vunpack.c.l.b16 %v474
        %v785 = vunpack.c.h.b16 %v474
        %v786 = vunpack.c.l.b16 %v475
        %v787 = vunpack.c.h.b16 %v475
        %v788 = vunpack.c.l.b16 %v476
        %v789 = vunpack.c.h.b16 %v476
        %v790 = vunpack.c.l.b16 %v477
        %v791 = vunpack.c.h.b16 %v477
        %v792 = vunpack.c.l.b16 %v478
        %v793 = vunpack.c.h.b16 %v478
        %v794 = vunpack.c.l.b16 %v479
        %v795 = vunpack.c.h.b16 %v479
        %v796 = vunpack.c.l.b16 %v480
        %v797 = vunpack.c.h.b16 %v480
        %v798 = vunpack.c.l.b16 %v481
        %v799 = vunpack.c.h.b16 %v481
        %v800 = vpack.c.b16 %v610, %v608
        %v801 = vpack.c.b16 %v611, %v609
        %v802 = vpack.c.b16 %v614, %v612
        %v803 = vpack.c.b16 %v615, %v613
        %v804 = vpack.c.b16 %v618, %v616
        %v805 = vpack.c.b16 %v619, %v617
        %v806 = vpack.c.b16 %v622, %v620
        %v807 = vpack.c.b16 %v623, %v621
        %v808 = vpack.c.b16 %v626, %v624
        %v809 = vpack.c.b16 %v627, %v625
        %v810 = vpack.c.b16 %v630, %v628
        %v811 = vpack.c.b16 %v631, %v629
        %v812 = vpack.c.b16 %v634, %v632
        %v813 = vpack.c.b16 %v635, %v633
        %v814 = vpack.c.b16 %v638, %v636
        %v815 = vpack.c.b16 %v639, %v637
        %v816 = vpack.c.b16 %v642, %v640
        %v817 = vpack.c.b16 %v643, %v641
        %v818 = vpack.c.b16 %v646, %v644
        %v819 = vpack.c.b16 %v647, %v645
        %v820 = vpack.c.b16 %v650, %v648
        %v821 = vpack.c.b16 %v651, %v649
        %v822 = vpack.c.b16 %v654, %v652
        %v823 = vpack.c.b16 %v655, %v653
        %v824 = vpack.c.b16 %v658, %v656
        %v825 = vpack.c.b16 %v659, %v657
        %v826 = vpack.c.b16 %v662, %v660
        %v827 = vpack.c.b16 %v663, %v661
        %v828 = vpack.c.b16 %v666, %v664
        %v829 = vpack.c.b16 %v667, %v665
        %v830 = vpack.c.b16 %v670, %v668
        %v831 = vpack.c.b16 %v671, %v669
        %v832 = vpack.c.b16 %v674, %v672
        %v833 = vpack.c.b16 %v675, %v673
        %v834 = vpack.c.b16 %v678, %v676
        %v835 = vpack.c.b16 %v679, %v677
        %v836 = vpack.c.b16 %v682, %v680
        %v837 = vpack.c.b16 %v683, %v681
        %v838 = vpack.c.b16 %v686, %v684
        %v839 = vpack.c.b16 %v687, %v685
        %v840 = vpack.c.b16 %v690, %v688
        %v841 = vpack.c.b16 %v691, %v689
        %v842 = vpack.c.b16 %v694, %v692
        %v843 = vpack.c.b16 %v695, %v693
        %v844 = vpack.c.b16 %v698, %v696
        %v845 = vpack.c.b16 %v699, %v697
        %v846 = vpack.c.b16 %v702, %v700
        %v847 = vpack.c.b16 %v703, %v701
        %v848 = vpack.c.b16 %v706, %v704
        %v849 = vpack.c.b16 %v707, %v705
        %v850 = vpack.c.b16 %v710, %v708
        %v851 = vpack.c.b16 %v711, %v709
        %v852 = vpack.c.b16 %v714, %v712
        %v853 = vpack.c.b16 %v715, %v713
        %v854 = vpack.c.b16 %v718, %v716
        %v855 = vpack.c.b16 %v719, %v717
        %v856 = vpack.c.b16 %v722, %v720
        %v857 = vpack.c.b16 %v723, %v721
        %v858 = vpack.c.b16 %v726, %v724
        %v859 = vpack.c.b16 %v727, %v725
        %v860 = vpack.c.b16 %v730, %v728
        %v861 = vpack.c.b16 %v731, %v729
        %v862 = vpack.c.b16 %v734, %v732
        %v863 = vpack.c.b16 %v735, %v733
        %v864 = vpack.c.b16 %v738, %v736
        %v865 = vpack.c.b16 %v739, %v737
        %v866 = vpack.c.b16 %v742, %v740
        %v867 = vpack.c.b16 %v743, %v741
        %v868 = vpack.c.b16 %v746, %v744
        %v869 = vpack.c.b16 %v747, %v745
        %v870 = vpack.c.b16 %v750, %v748
        %v871 = vpack.c.b16 %v751, %v749
        %v872 = vpack.c.b16 %v754, %v752
        %v873 = vpack.c.b16 %v755, %v753
        %v874 = vpack.c.b16 %v758, %v756
        %v875 = vpack.c.b16 %v759, %v757
        %v876 = vpack.c.b16 %v762, %v760
        %v877 = vpack.c.b16 %v763, %v761
        %v878 = vpack.c.b16 %v766, %v764
        %v879 = vpack.c.b16 %v767, %v765
        %v880 = vpack.c.b16 %v770, %v768
        %v881 = vpack.c.b16 %v771, %v769
        %v882 = vpack.c.b16 %v774, %v772
        %v883 = vpack.c.b16 %v775, %v773
        %v884 = vpack.c.b16 %v778, %v776
        %v885 = vpack.c.b16 %v779, %v777
        %v886 = vpack.c.b16 %v782, %v780
        %v887 = vpack.c.b16 %v783, %v781
        %v888 = vpack.c.b16 %v786, %v784
        %v889 = vpack.c.b16 %v787, %v785
        %v890 = vpack.c.b16 %v790, %v788
        %v891 = vpack.c.b16 %v791, %v789
        %v892 = vpack.c.b16 %v794, %v792
        %v893 = vpack.c.b16 %v795, %v793
        %v894 = vpack.c.b16 %v798, %v796
        %v895 = vpack.c.b16 %v799, %v797
        %992 = vmatprep.subr.bf16.mxu0 %v801
        %993 = vmatpush1.bf16.msra.mxu0 %v800
        %994 = vmatprep.subr.bf16.mxu0 %v803
        %995 = vmatpush1.bf16.msra.mxu0 %v802
        %996 = vmatprep.subr.bf16.mxu0 %v805
        %997 = vmatpush1.bf16.msra.mxu0 %v804
        %998 = vmatprep.subr.bf16.mxu0 %v807
        %999 = vmatpush1.bf16.msra.mxu0 %v806
        %1000 = vmatprep.subr.bf16.mxu0 %v809
        %1001 = vmatpush1.bf16.msra.mxu0 %v808
        %1002 = vmatprep.subr.bf16.mxu0 %v811
        %1003 = vmatpush1.bf16.msra.mxu0 %v810
        %1004 = vmatprep.subr.bf16.mxu0 %v813
        %1005 = vmatpush1.bf16.msra.mxu0 %v812
        %1006 = vmatprep.subr.bf16.mxu0 %v815
        %1007 = vmatpush1.bf16.msra.mxu0 %v814
        %1008 = vmatprep.subr.bf16.mxu0 %v817
        %1009 = vmatpush1.bf16.msra.mxu0 %v816
        %1010 = vmatprep.subr.bf16.mxu0 %v819
        %1011 = vmatpush1.bf16.msra.mxu0 %v818
        %1012 = vmatprep.subr.bf16.mxu0 %v821
        %1013 = vmatpush1.bf16.msra.mxu0 %v820
        %1014 = vmatprep.subr.bf16.mxu0 %v823
        %1015 = vmatpush1.bf16.msra.mxu0 %v822
        %1016 = vmatprep.subr.bf16.mxu0 %v825
        %1017 = vmatpush1.bf16.msra.mxu0 %v824
        %1018 = vmatprep.subr.bf16.mxu0 %v827
        %1019 = vmatpush1.bf16.msra.mxu0 %v826
        %1020 = vmatprep.subr.bf16.mxu0 %v829
        %1021 = vmatpush1.bf16.msra.mxu0 %v828
        %1022 = vmatprep.subr.bf16.mxu0 %v831
        %1023 = vmatpush1.bf16.msra.mxu0 %v830
        %1024 = vmatprep.mubr.bf16.mxu0 %v501
        %1025 = vmatmul.mubr.bf16.gmra.mrb[0].mxu0 %v500
        %v1026 = vpop.f32.mrb[0].mxu0
        %v1027 = vadd.f32 0.0, %v1026
        %v1028 = vpop.f32.mrb[0].mxu0
        %v1029 = vadd.f32 0.0, %v1028
        %v1030 = vpop.f32.mrb[0].mxu0
        %v1031 = vadd.f32 0.0, %v1030
        %v1032 = vpop.f32.mrb[0].mxu0
        %v1033 = vadd.f32 0.0, %v1032
        %1034 = vdwg.mxu0
        %1035 = vmatprep.subr.bf16.mxu0 %v833
        %1036 = vmatpush1.bf16.msra.mxu0 %v832
        %1037 = vmatprep.subr.bf16.mxu0 %v835
        %1038 = vmatpush1.bf16.msra.mxu0 %v834
        %1039 = vmatprep.subr.bf16.mxu0 %v837
        %1040 = vmatpush1.bf16.msra.mxu0 %v836
        %1041 = vmatprep.subr.bf16.mxu0 %v839
        %1042 = vmatpush1.bf16.msra.mxu0 %v838
        %1043 = vmatprep.subr.bf16.mxu0 %v841
        %1044 = vmatpush1.bf16.msra.mxu0 %v840
        %1045 = vmatprep.subr.bf16.mxu0 %v843
        %1046 = vmatpush1.bf16.msra.mxu0 %v842
        %1047 = vmatprep.subr.bf16.mxu0 %v845
        %1048 = vmatpush1.bf16.msra.mxu0 %v844
        %1049 = vmatprep.subr.bf16.mxu0 %v847
        %1050 = vmatpush1.bf16.msra.mxu0 %v846
        %1051 = vmatprep.subr.bf16.mxu0 %v849
        %1052 = vmatpush1.bf16.msra.mxu0 %v848
        %1053 = vmatprep.subr.bf16.mxu0 %v851
        %1054 = vmatpush1.bf16.msra.mxu0 %v850
        %1055 = vmatprep.subr.bf16.mxu0 %v853
        %1056 = vmatpush1.bf16.msra.mxu0 %v852
        %1057 = vmatprep.subr.bf16.mxu0 %v855
        %1058 = vmatpush1.bf16.msra.mxu0 %v854
        %1059 = vmatprep.subr.bf16.mxu0 %v857
        %1060 = vmatpush1.bf16.msra.mxu0 %v856
        %1061 = vmatprep.subr.bf16.mxu0 %v859
        %1062 = vmatpush1.bf16.msra.mxu0 %v858
        %1063 = vmatprep.subr.bf16.mxu0 %v861
        %1064 = vmatpush1.bf16.msra.mxu0 %v860
        %1065 = vmatprep.subr.bf16.mxu0 %v863
        %1066 = vmatpush1.bf16.msra.mxu0 %v862
        %1067 = vmatprep.mubr.bf16.mxu0 %v503
        %1068 = vmatmul.mubr.bf16.gmra.mrb[0].mxu0 %v502
        %v1069 = vpop.f32.mrb[0].mxu0
        %v1070 = vadd.f32 %v1027, %v1069
        %v1071 = vpop.f32.mrb[0].mxu0
        %v1072 = vadd.f32 %v1029, %v1071
        %v1073 = vpop.f32.mrb[0].mxu0
        %v1074 = vadd.f32 %v1031, %v1073
        %v1075 = vpop.f32.mrb[0].mxu0
        %v1076 = vadd.f32 %v1033, %v1075
        %1077 = vdwg.mxu0
        %1078 = vmatprep.subr.bf16.mxu0 %v865
        %1079 = vmatpush1.bf16.msra.mxu0 %v864
        %1080 = vmatprep.subr.bf16.mxu0 %v867
        %1081 = vmatpush1.bf16.msra.mxu0 %v866
        %1082 = vmatprep.subr.bf16.mxu0 %v869
        %1083 = vmatpush1.bf16.msra.mxu0 %v868
        %1084 = vmatprep.subr.bf16.mxu0 %v871
        %1085 = vmatpush1.bf16.msra.mxu0 %v870
        %1086 = vmatprep.subr.bf16.mxu0 %v873
        %1087 = vmatpush1.bf16.msra.mxu0 %v872
        %1088 = vmatprep.subr.bf16.mxu0 %v875
        %1089 = vmatpush1.bf16.msra.mxu0 %v874
        %1090 = vmatprep.subr.bf16.mxu0 %v877
        %1091 = vmatpush1.bf16.msra.mxu0 %v876
        %1092 = vmatprep.subr.bf16.mxu0 %v879
        %1093 = vmatpush1.bf16.msra.mxu0 %v878
        %1094 = vmatprep.subr.bf16.mxu0 %v881
        %1095 = vmatpush1.bf16.msra.mxu0 %v880
        %1096 = vmatprep.subr.bf16.mxu0 %v883
        %1097 = vmatpush1.bf16.msra.mxu0 %v882
        %1098 = vmatprep.subr.bf16.mxu0 %v885
        %1099 = vmatpush1.bf16.msra.mxu0 %v884
        %1100 = vmatprep.subr.bf16.mxu0 %v887
        %1101 = vmatpush1.bf16.msra.mxu0 %v886
        %1102 = vmatprep.subr.bf16.mxu0 %v889
        %1103 = vmatpush1.bf16.msra.mxu0 %v888
        %1104 = vmatprep.subr.bf16.mxu0 %v891
        %1105 = vmatpush1.bf16.msra.mxu0 %v890
        %1106 = vmatprep.subr.bf16.mxu0 %v893
        %1107 = vmatpush1.bf16.msra.mxu0 %v892
        %1108 = vmatprep.subr.bf16.mxu0 %v895
        %1109 = vmatpush1.bf16.msra.mxu0 %v894
        %1110 = vmatprep.mubr.bf16.mxu0 %v505
        %1111 = vmatmul.mubr.bf16.gmra.mrb[0].mxu0 %v504
        %v1112 = vpop.f32.mrb[0].mxu0
        %v1113 = vadd.f32 %v1070, %v1112
        %v1114 = vpop.f32.mrb[0].mxu0
        %v1115 = vadd.f32 %v1072, %v1114
        %v1116 = vpop.f32.mrb[0].mxu0
        %v1117 = vadd.f32 %v1074, %v1116
        %v1118 = vpop.f32.mrb[0].mxu0
        %v1119 = vadd.f32 %v1076, %v1118
        %1120 = vdwg.mxu0
        %v1121 = vld [vmem:[%s321] sm:$0xf]
        %v1122 = vld [vmem:[%s321 + $0x4] sm:$0xf]
        %v1123 = vpack.c.bf16 %v1117, %v1113
        %v1124 = vpack.c.bf16 %v1119, %v1115
        %v1125 = vld [vmem:[%s4] sm:$0x3]
        %v1127 = vlaneseq
        %v1128 = vshrl.u32 %v1127, 7
        %v1129 = vsub.s32 0, %v1128
        %v1130 = vrot.slane %v1125, %v1129
        %v1131 = vlaneseq
        %v1132 = vshrl.u32 %v1131, 7
        %v1133 = vsub.s32 1, %v1132
        %v1134 = vrot.slane %v1125, %v1133
        %v1139 = vunpack.c.l.b16 %v1121
        %v1140 = vunpack.c.l.b16 %v1122
        %v1141 = vpack.c.b16 %v1140, %v1139
        %vm1142 = vcmask 130048
        %v1144 = vsel %vm1142, %v1141, 0
        %1146 = vmatprep.subr.bf16.mxu0 %v1124
        %1147 = vmatpush1.bf16.msra.mxu0 %v1123
        %1148 = vmatprep.subr.bf16.mxu0 0
        %1149 = vmatpush1.bf16.msra.mxu0 0
        %1150 = vmatprep.subr.bf16.mxu0 0
        %1151 = vmatpush1.bf16.msra.mxu0 0
        %1152 = vmatprep.subr.bf16.mxu0 0
        %1153 = vmatpush1.bf16.msra.mxu0 0
        %1154 = vmatprep.subr.bf16.mxu0 0
        %1155 = vmatpush1.bf16.msra.mxu0 0
        %1156 = vmatprep.subr.bf16.mxu0 0
        %1157 = vmatpush1.bf16.msra.mxu0 0
        %1158 = vmatprep.subr.bf16.mxu0 0
        %1159 = vmatpush1.bf16.msra.mxu0 0
        %1160 = vmatprep.subr.bf16.mxu0 0
        %1161 = vmatpush1.bf16.msra.mxu0 0
        %1162 = vmatprep.subr.bf16.mxu0 0
        %1163 = vmatpush1.bf16.msra.mxu0 0
        %1164 = vmatprep.subr.bf16.mxu0 0
        %1165 = vmatpush1.bf16.msra.mxu0 0
        %1166 = vmatprep.subr.bf16.mxu0 0
        %1167 = vmatpush1.bf16.msra.mxu0 0
        %1168 = vmatprep.subr.bf16.mxu0 0
        %1169 = vmatpush1.bf16.msra.mxu0 0
        %1170 = vmatprep.subr.bf16.mxu0 0
        %1171 = vmatpush1.bf16.msra.mxu0 0
        %1172 = vmatprep.subr.bf16.mxu0 0
        %1173 = vmatpush1.bf16.msra.mxu0 0
        %1174 = vmatprep.subr.bf16.mxu0 0
        %1175 = vmatpush1.bf16.msra.mxu0 0
        %1176 = vmatprep.subr.bf16.mxu0 0
        %1177 = vmatpush1.bf16.msra.mxu0 0
        %1178 = vmatprep.mubr.bf16.mxu0 0
        %1179 = vmatmul.mubr.bf16.gmra.mrb[0].mxu0 %v1144
        %v1180 = vpop.f32.mrb[0].mxu0
        %v1181 = vadd.f32 %v1130, %v1180
        %v1182 = vpop.f32.mrb[0].mxu0
        %v1183 = vadd.f32 %v1134, %v1182
        %v1184 = vpop.f32.mrb[0].mxu0
        %v1185 = vadd.f32 %v1130, %v1184
        %v1186 = vpop.f32.mrb[0].mxu0
        %v1187 = vadd.f32 %v1134, %v1186
        %1188 = vdwg.mxu0
        %v1189 = vmax.f32 %v1181, 0.0
        %v1190 = vmax.f32 %v1183, 0.0
        %v1191 = vmax.f32 %v1185, 0.0
        %v1192 = vmax.f32 %v1187, 0.0
        %v1193 = vpack.c.bf16 %v1191, %v1189
        %v1194 = vpack.c.bf16 %v1192, %v1190
        %v1195 = vld [vmem:[#allocation8] sm:$0xf]
        %v1196 = vld [vmem:[#allocation8 + $0x4] sm:$0xf]
        %v1197 = vld [vmem:[#allocation8 + $0x8] sm:$0xf]
        %v1198 = vld [vmem:[#allocation8 + $0xc] sm:$0xf]
        %v1199 = vld [vmem:[#allocation8 + $0x10] sm:$0xf]
        %v1200 = vld [vmem:[#allocation8 + $0x14] sm:$0xf]
        %v1201 = vld [vmem:[#allocation8 + $0x18] sm:$0xf]
        %v1202 = vld [vmem:[#allocation8 + $0x1c] sm:$0xf]
        %v1203 = vld [vmem:[#allocation8 + $0x20] sm:$0xf]
        %v1204 = vld [vmem:[#allocation8 + $0x24] sm:$0xf]
        %v1205 = vld [vmem:[#allocation8 + $0x28] sm:$0xf]
        %v1206 = vld [vmem:[#allocation8 + $0x2c] sm:$0xf]
        %v1207 = vld [vmem:[#allocation8 + $0x30] sm:$0xf]
        %v1208 = vld [vmem:[#allocation8 + $0x34] sm:$0xf]
        %v1209 = vld [vmem:[#allocation8 + $0x38] sm:$0xf]
        %v1210 = vld [vmem:[#allocation8 + $0x3c] sm:$0xf]
        %v1211 = vld [vmem:[#allocation8 + $0x40] sm:$0xf]
        %v1212 = vld [vmem:[#allocation8 + $0x44] sm:$0xf]
        %v1213 = vld [vmem:[#allocation8 + $0x48] sm:$0xf]
        %v1214 = vld [vmem:[#allocation8 + $0x4c] sm:$0xf]
        %v1215 = vld [vmem:[#allocation8 + $0x50] sm:$0xf]
        %v1216 = vld [vmem:[#allocation8 + $0x54] sm:$0xf]
        %v1217 = vld [vmem:[#allocation8 + $0x58] sm:$0xf]
        %v1218 = vld [vmem:[#allocation8 + $0x5c] sm:$0xf]
        %v1219 = vld [vmem:[#allocation8 + $0x60] sm:$0xf]
        %v1220 = vld [vmem:[#allocation8 + $0x64] sm:$0xf]
        %v1221 = vld [vmem:[#allocation8 + $0x68] sm:$0xf]
        %v1222 = vld [vmem:[#allocation8 + $0x6c] sm:$0xf]
        %v1223 = vld [vmem:[#allocation8 + $0x70] sm:$0xf]
        %v1224 = vld [vmem:[#allocation8 + $0x74] sm:$0xf]
        %v1225 = vld [vmem:[#allocation8 + $0x78] sm:$0xf]
        %v1226 = vld [vmem:[#allocation8 + $0x7c] sm:$0xf]
        %v1259 = vunpack.c.l.b16 %v1195
        %v1260 = vunpack.c.l.b16 %v1196
        %v1261 = vunpack.c.l.b16 %v1197
        %v1262 = vunpack.c.l.b16 %v1198
        %v1263 = vunpack.c.l.b16 %v1199
        %v1264 = vunpack.c.l.b16 %v1200
        %v1265 = vunpack.c.l.b16 %v1201
        %v1266 = vunpack.c.l.b16 %v1202
        %v1267 = vunpack.c.l.b16 %v1203
        %v1268 = vunpack.c.l.b16 %v1204
        %v1269 = vunpack.c.l.b16 %v1205
        %v1270 = vunpack.c.l.b16 %v1206
        %v1271 = vunpack.c.l.b16 %v1207
        %v1272 = vunpack.c.l.b16 %v1208
        %v1273 = vunpack.c.l.b16 %v1209
        %v1274 = vunpack.c.l.b16 %v1210
        %v1275 = vunpack.c.l.b16 %v1211
        %v1276 = vunpack.c.l.b16 %v1212
        %v1277 = vunpack.c.l.b16 %v1213
        %v1278 = vunpack.c.l.b16 %v1214
        %v1279 = vunpack.c.l.b16 %v1215
        %v1280 = vunpack.c.l.b16 %v1216
        %v1281 = vunpack.c.l.b16 %v1217
        %v1282 = vunpack.c.l.b16 %v1218
        %v1283 = vunpack.c.l.b16 %v1219
        %v1284 = vunpack.c.l.b16 %v1220
        %v1285 = vunpack.c.l.b16 %v1221
        %v1286 = vunpack.c.l.b16 %v1222
        %v1287 = vunpack.c.l.b16 %v1223
        %v1288 = vunpack.c.l.b16 %v1224
        %v1289 = vunpack.c.l.b16 %v1225
        %v1290 = vunpack.c.l.b16 %v1226
        %v1291 = vpack.c.b16 %v1260, %v1259
        %v1292 = vpack.c.b16 %v1262, %v1261
        %v1293 = vpack.c.b16 %v1264, %v1263
        %v1294 = vpack.c.b16 %v1266, %v1265
        %v1295 = vpack.c.b16 %v1268, %v1267
        %v1296 = vpack.c.b16 %v1270, %v1269
        %v1297 = vpack.c.b16 %v1272, %v1271
        %v1298 = vpack.c.b16 %v1274, %v1273
        %v1299 = vpack.c.b16 %v1276, %v1275
        %v1300 = vpack.c.b16 %v1278, %v1277
        %v1301 = vpack.c.b16 %v1280, %v1279
        %v1302 = vpack.c.b16 %v1282, %v1281
        %v1303 = vpack.c.b16 %v1284, %v1283
        %v1304 = vpack.c.b16 %v1286, %v1285
        %v1305 = vpack.c.b16 %v1288, %v1287
        %v1306 = vpack.c.b16 %v1290, %v1289
        %1323 = vmatprep.subr.bf16.mxu0 0
        %1324 = vmatpush1.bf16.msra.mxu0 %v1291
        %1325 = vmatprep.subr.bf16.mxu0 0
        %1326 = vmatpush1.bf16.msra.mxu0 %v1292
        %1327 = vmatprep.subr.bf16.mxu0 0
        %1328 = vmatpush1.bf16.msra.mxu0 %v1293
        %1329 = vmatprep.subr.bf16.mxu0 0
        %1330 = vmatpush1.bf16.msra.mxu0 %v1294
        %1331 = vmatprep.subr.bf16.mxu0 0
        %1332 = vmatpush1.bf16.msra.mxu0 %v1295
        %1333 = vmatprep.subr.bf16.mxu0 0
        %1334 = vmatpush1.bf16.msra.mxu0 %v1296
        %1335 = vmatprep.subr.bf16.mxu0 0
        %1336 = vmatpush1.bf16.msra.mxu0 %v1297
        %1337 = vmatprep.subr.bf16.mxu0 0
        %1338 = vmatpush1.bf16.msra.mxu0 %v1298
        %1339 = vmatprep.subr.bf16.mxu0 0
        %1340 = vmatpush1.bf16.msra.mxu0 %v1299
        %1341 = vmatprep.subr.bf16.mxu0 0
        %1342 = vmatpush1.bf16.msra.mxu0 %v1300
        %1343 = vmatprep.subr.bf16.mxu0 0
        %1344 = vmatpush1.bf16.msra.mxu0 %v1301
        %1345 = vmatprep.subr.bf16.mxu0 0
        %1346 = vmatpush1.bf16.msra.mxu0 %v1302
        %1347 = vmatprep.subr.bf16.mxu0 0
        %1348 = vmatpush1.bf16.msra.mxu0 %v1303
        %1349 = vmatprep.subr.bf16.mxu0 0
        %1350 = vmatpush1.bf16.msra.mxu0 %v1304
        %1351 = vmatprep.subr.bf16.mxu0 0
        %1352 = vmatpush1.bf16.msra.mxu0 %v1305
        %1353 = vmatprep.subr.bf16.mxu0 0
        %1354 = vmatpush1.bf16.msra.mxu0 %v1306
        %1355 = vmatprep.mubr.bf16.mxu0 %v1194
        %1356 = vmatmul.mubr.bf16.gmra.mrb[0].mxu0 %v1193
        %v1357 = vpop.f32.mrb[0].mxu0
        %v1358 = vadd.f32 0.0, %v1357
        %v1359 = vpop.f32.mrb[0].mxu0
        %v1360 = vpop.f32.mrb[0].mxu0
        %v1361 = vadd.f32 0.0, %v1360
        %v1362 = vpop.f32.mrb[0].mxu0
        %1363 = vdwg.mxu0
        %v1364 = vld [vmem:[%s378] sm:$0x1]
        %v1365 = vpack.c.bf16 %v1361, %v1358
        %v1366 = vld [vmem:[%s6] sm:$0x1]
        %v1368 = vsel %vm1142, %v1364, 0
        %1370 = vmatprep.subr.bf16.mxu0 0
        %1371 = vmatpush1.bf16.msra.mxu0 %v1365
        %1372 = vmatprep.subr.bf16.mxu0 0
        %1373 = vmatpush1.bf16.msra.mxu0 0
        %1374 = vmatprep.subr.bf16.mxu0 0
        %1375 = vmatpush1.bf16.msra.mxu0 0
        %1376 = vmatprep.subr.bf16.mxu0 0
        %1377 = vmatpush1.bf16.msra.mxu0 0
        %1378 = vmatprep.subr.bf16.mxu0 0
        %1379 = vmatpush1.bf16.msra.mxu0 0
        %1380 = vmatprep.subr.bf16.mxu0 0
        %1381 = vmatpush1.bf16.msra.mxu0 0
        %1382 = vmatprep.subr.bf16.mxu0 0
        %1383 = vmatpush1.bf16.msra.mxu0 0
        %1384 = vmatprep.subr.bf16.mxu0 0
        %1385 = vmatpush1.bf16.msra.mxu0 0
        %1386 = vmatprep.subr.bf16.mxu0 0
        %1387 = vmatpush1.bf16.msra.mxu0 0
        %1388 = vmatprep.subr.bf16.mxu0 0
        %1389 = vmatpush1.bf16.msra.mxu0 0
        %1390 = vmatprep.subr.bf16.mxu0 0
        %1391 = vmatpush1.bf16.msra.mxu0 0
        %1392 = vmatprep.subr.bf16.mxu0 0
        %1393 = vmatpush1.bf16.msra.mxu0 0
        %1394 = vmatprep.subr.bf16.mxu0 0
        %1395 = vmatpush1.bf16.msra.mxu0 0
        %1396 = vmatprep.subr.bf16.mxu0 0
        %1397 = vmatpush1.bf16.msra.mxu0 0
        %1398 = vmatprep.subr.bf16.mxu0 0
        %1399 = vmatpush1.bf16.msra.mxu0 0
        %1400 = vmatprep.subr.bf16.mxu0 0
        %1401 = vmatpush1.bf16.msra.mxu0 0
        %1402 = vmatprep.mubr.bf16.mxu0 0
        %1403 = vmatmul.mubr.bf16.gmra.mrb[0].mxu0 %v1368
        %v1404 = vpop.f32.mrb[0].mxu0
        %v1405 = vadd.f32 %v1366, %v1404
        %v1406 = vpop.f32.mrb[0].mxu0
        %v1407 = vpop.f32.mrb[0].mxu0
        %v1408 = vpop.f32.mrb[0].mxu0
        %1409 = vdwg.mxu0
        %1410 = vst [vmem:[%s375] sm:$0x1] %v1405
        %s1411 = sand.u32 %s198, 1
        %s1412 = scalar_lea.sflag [#allocation4], %s1411
        %s1413 = sand.u32 %s198, 1
        %s1414 = scalar_lea.vmem [#allocation10], %s1413
        // Predicated region
        $region65: #{tpu_custom_call.1} parent=47 // pred_check
          %p1415 = pneg %p208
        $region66: #{tpu_custom_call.1} parent=47 // pred_check_branch
          %1417 = sbr.rel (%p1415) target = $region68
        $region67: #{tpu_custom_call.1} parent=47 // pred_region
          %s1419 = ssub.s32 16, 16
          %1420 = vsyncadd %s1412, %s1419
          %s1421 = smul.addr %s28, 16
          %s1422 = scalar_lea.hbm %s7, %s1421
          %s1424 = sshll.u32 %s1414, 4
          %s1425 = int_to_ptr.vmem [resolvable:$true] %s1424
          %1427 = dma.vmem_to_hbm [thread:$0]  %s1425, 16, %s1422, %s1412
        $region68: #{tpu_custom_call.1} parent=47 // pred_fallthru
          _
      $region48: #{tpu_custom_call.1} parent=5 // pred_fallthru
        _
      %p1428 = scmp.le.s32.totalorder 2, %s23
      // Predicated region
      $region69: #{tpu_custom_call.1} parent=5 // pred_check
        %p1429 = pneg %p1428
      $region70: #{tpu_custom_call.1} parent=5 // pred_check_branch
        %1431 = sbr.rel (%p1429) target = $region72
      $region71: #{tpu_custom_call.1} parent=5 // pred_region
        %s1432 = ssub.s32 %s23, 2
        // Predicated region
        $region73: #{tpu_custom_call.1} parent=71 // pred_check
          %p1433 = pneg %p214
        $region74: #{tpu_custom_call.1} parent=71 // pred_check_branch
          %1435 = sbr.rel (%p1433) target = $region76
        $region75: #{tpu_custom_call.1} parent=71 // pred_region
          %s1436 = sand.u32 %s199, 1
          %s1437 = scalar_lea.sflag [#allocation4], %s1436
          %s1438 = sand.u32 %s199, 1
          %s1439 = scalar_lea.vmem [#allocation10], %s1438
          %1440 = dma.done %s1437, 16
        $region76: #{tpu_custom_call.1} parent=71 // pred_fallthru
          _
      $region72: #{tpu_custom_call.1} parent=5 // pred_fallthru
        _
    $region6: #{tpu_custom_call.1} parent=1 // loop_footer
      %s27 = sadd.s32 1, %s23
    $region7: #{tpu_custom_call.1} parent=1 // loop_footer_branch
      %22 = sbr.rel target = $region3
    $region8: #{tpu_custom_call.1} parent=1 // loop_exit
      _
    %1441 = vsyncpa [#allocation3], 1
    %s1442 = scalar_lea.sflag [#allocation3], 1
    %1443 = vsyncpa %s1442, 1
    %1444 = vsyncpa [#allocation6], 1
    %s1445 = scalar_lea.sflag [#allocation6], 1
    %1446 = vsyncpa %s1445, 1
    %1447 = vsyncpa [#allocation9], 1
    %1448 = vsyncpa [#allocation4], 1
    %s1449 = scalar_lea.sflag [#allocation4], 1
    %1450 = vsyncpa %s1449, 1

</llo_original>
